<compile_context>
chip_gen: v6e
topology: v6e:2x2x1
jax: 0.10.0
libtpu: 0.0.40
codegen_flags: <defaults>
</compile_context>

<pallas_src>
import jax
import jax.numpy as jnp
from jax.experimental import pallas as pl
from jax.experimental.pallas import tpu as pltpu


def _round_up(v: int, m: int) -> int:
    return ((v + m - 1) // m) * m


def _pick_tile(dim_pad: int, preferred: int) -> int:
    """Largest multiple of 128 <= preferred that divides dim_pad (dim_pad % 128 == 0)."""
    t = max(128, min(preferred, dim_pad))
    while dim_pad % t:
        t -= 128
    return t


def _support_kernel(x_ref, w_ref, out_ref):
    # support_tile = X_tile @ W   (f32 MXU accumulation)
    # TODO(synk): K-tile over F_in if in_features ever gets large; GCN feature
    # dims are small so a resident (F_in_pad, F_out_pad) weight block is fine.
    out_ref[...] = jnp.dot(
        x_ref[...], w_ref[...], preferred_element_type=jnp.float32
    ).astype(out_ref.dtype)


def _adj_matmul_kernel(adj_ref, sup_ref, b_ref, out_ref, acc_ref):
    # out_tile = sum_k adj[i, k] @ support[k, :]  (+ bias), f32 accumulator.
    k = pl.program_id(1)

    @pl.when(k == 0)
    def _():
        acc_ref[...] = jnp.zeros_like(acc_ref)

    # Cast adj up to f32 (no-op when already f32); support is always f32, so
    # the MXU accumulates in f32 regardless of the adjacency stream dtype.
    acc_ref[...] += jnp.dot(
        adj_ref[...].astype(jnp.float32), sup_ref[...],
        preferred_element_type=jnp.float32,
    )

    @pl.when(k == pl.num_programs(1) - 1)
    def _():
        out_ref[...] = (acc_ref[...] + b_ref[...]).astype(out_ref.dtype)


def sparse_graph_convolution(x, adj, weight, bias=None, *,
                             adj_dtype=None, tile_m=None, tile_k=None):
    """GCN layer: adj @ (x @ weight) [+ bias], as two Pallas TPU kernels."""
    N, f_in = x.shape
    f_out = weight.shape[1]
    assert adj.shape == (N, N)
    assert weight.shape == (f_in, f_out)

    out_dtype = jnp.dtype(x.dtype)
    adt = jnp.dtype(adj_dtype) if adj_dtype is not None else jnp.dtype(adj.dtype)

    # ---- generation-aware tile sizes and VMEM budget -----------------------
    try:
        vmem_cap = int(pltpu.get_tpu_info().vmem_capacity_bytes)
    except Exception:
        vmem_cap = 64 * 1024 * 1024  # conservative (v7x-sized) fallback
    if vmem_cap >= 96 * 1024 * 1024:           # v5e / v6e: 128 MiB per TC
        tm_pref, tk_pref = 512, 1024
        vmem_budget = min(vmem_cap - 16 * 1024 * 1024, 110 * 1024 * 1024)
    else:                                       # v7x: 64 MiB per TC
        tm_pref, tk_pref = 256, 512
        vmem_budget = max(vmem_cap - 8 * 1024 * 1024, 32 * 1024 * 1024)
    if tile_m is not None:
        assert tile_m % 128 == 0
        tm_pref = tile_m
    if tile_k is not None:
        assert tile_k % 128 == 0
        tk_pref = tile_k

    # ---- padding: K dim only to 128; M dim to the row-tile multiple --------
    nk_pad = _round_up(N, 128)                  # adj cols / X rows / support rows
    fi_pad = _round_up(f_in, 128)
    fo_pad = _round_up(f_out, 128)
    tm = min(tm_pref, _round_up(N, 128))
    tk = _pick_tile(nk_pad, tk_pref)
    m_pad = _round_up(N, tm)

    x32 = x.astype(jnp.float32)
    xp = (jnp.pad(x32, ((0, nk_pad - N), (0, fi_pad - f_in)))
          if (nk_pad != N or fi_pad != f_in) else x32)
    w32 = weight.astype(jnp.float32)
    wp = (jnp.pad(w32, ((0, fi_pad - f_in), (0, fo_pad - f_out)))
          if (fi_pad != f_in or fo_pad != f_out) else w32)

    # N^2 adjacency: avoid the wrapper-side pad/cast copy when not needed.
    ap = adj if jnp.dtype(adj.dtype) == adt else adj.astype(adt)
    if m_pad != N or nk_pad != N:
        ap = jnp.pad(ap, ((0, m_pad - N), (0, nk_pad - N)))

    if bias is None:
        bp = jnp.zeros((1, fo_pad), jnp.float32)
    else:
        bp = jnp.zeros((1, fo_pad), jnp.float32).at[0, :f_out].set(
            bias.astype(jnp.float32))

    # ---- kernel 1: support = X @ W  (row-tiled, f32) ------------------------
    ts = _pick_tile(nk_pad, 512)
    support = pl.pallas_call(
        _support_kernel,
        out_shape=jax.ShapeDtypeStruct((nk_pad, fo_pad), jnp.float32),
        grid=(nk_pad // ts,),
        in_specs=[
            pl.BlockSpec((ts, fi_pad), lambda i: (i, 0)),
            pl.BlockSpec((fi_pad, fo_pad), lambda i: (0, 0)),
        ],
        out_specs=pl.BlockSpec((ts, fo_pad), lambda i: (i, 0)),
        compiler_params=pltpu.CompilerParams(
            dimension_semantics=("parallel",)),
        cost_estimate=pl.CostEstimate(
            flops=2 * nk_pad * fi_pad * fo_pad,
            transcendentals=0,
            bytes_accessed=(nk_pad * fi_pad + fi_pad * fo_pad
                            + nk_pad * fo_pad) * 4),
    )(xp, wp)

    # ---- kernel 2: out = adj @ support + bias  (M x K grid) -----------------
    adj_isz = adt.itemsize
    vmem_est = (2 * tm * tk * adj_isz            # adj blocks (double-buffered)
                + 2 * tk * fo_pad * 4            # support blocks
                + 2 * 8 * fo_pad * 4             # bias (sublane-padded)
                + 2 * tm * fo_pad * out_dtype.itemsize
                + tm * fo_pad * 4)               # f32 accumulator scratch
    vmem_limit = None
    if vmem_est > 32 * 1024 * 1024:
        vmem_limit = min(int(vmem_est * 5 // 4), vmem_budget)

    cost = pl.CostEstimate(
        flops=2 * m_pad * nk_pad * fo_pad,
        transcendentals=0,
        bytes_accessed=(m_pad * nk_pad * adj_isz
                        + (m_pad // tm) * nk_pad * fo_pad * 4
                        + fo_pad * 4
                        + m_pad * fo_pad * out_dtype.itemsize),
    )

    out_padded = pl.pallas_call(
        _adj_matmul_kernel,
        out_shape=jax.ShapeDtypeStruct((m_pad, fo_pad), out_dtype),
        grid=(m_pad // tm, nk_pad // tk),
        in_specs=[
            pl.BlockSpec((tm, tk), lambda i, k: (i, k)),       # adj block
            pl.BlockSpec((tk, fo_pad), lambda i, k: (k, 0)),   # support block
            pl.BlockSpec((1, fo_pad), lambda i, k: (0, 0)),    # bias (invariant)
        ],
        out_specs=pl.BlockSpec((tm, fo_pad), lambda i, k: (i, 0)),
        scratch_shapes=[pltpu.VMEM((tm, fo_pad), jnp.float32)],
        compiler_params=pltpu.CompilerParams(
            dimension_semantics=("parallel", "arbitrary"),
            vmem_limit_bytes=vmem_limit,
        ),
        cost_estimate=cost,
    )(ap, support, bp)

    if m_pad != N or fo_pad != f_out:
        out_padded = out_padded[:N, :f_out]
    return out_padded


def xavier_uniform(key, shape, dtype=jnp.float32):
    fan_in, fan_out = shape
    bound = (6.0 / (fan_in + fan_out)) ** 0.5
    return jax.random.uniform(key, shape, dtype, minval=-bound, maxval=bound)


if __name__ == "__main__":
    # Module config: SparseGraphConvolution(in_features=32, out_features=32, bias=False)
    N, F_IN, F_OUT = 16, 32, 32
    key = jax.random.PRNGKey(0)
    k_x, k_adj, k_w, k_b = jax.random.split(key, 4)

    # Synthetic inputs (dense representations of the sparse operands).
    x = jax.random.normal(k_x, (N, F_IN), dtype=jnp.float32)
    raw = jax.random.uniform(k_adj, (N, N), dtype=jnp.float32)
    mask = (raw > 0.7).astype(jnp.float32) + jnp.eye(N, dtype=jnp.float32)
    adj = mask / jnp.sum(mask, axis=1, keepdims=True)

    # Deterministic parameter init matching reset_parameters(): xavier_uniform_.
    weight = xavier_uniform(k_w, (F_IN, F_OUT))

    # Reference in plain JAX (same math as the PyTorch module).
    ref = adj @ (x @ weight)

    # 1) Default module path: bias=False, exact f32 parity.
    out = sparse_graph_convolution(x, adj, weight, None)
    jax.block_until_ready(out)
    assert out.shape == (N, F_OUT)
    assert jnp.allclose(out, ref, atol=1e-5, rtol=1e-5)

    # 2) bias=True path.
    bias = jax.random.normal(k_b, (F_OUT,), dtype=jnp.float32)
    out_b = sparse_graph_convolution(x, adj, weight, bias)
    jax.block_until_ready(out_b)
    assert jnp.allclose(out_b, ref + bias[None, :], atol=1e-5, rtol=1e-5)

    # 3) bf16 adjacency stream (recommended for large graphs: halves the HBM
    #    bytes of the dominant N^2 read; support and accumulation stay f32).
    out_bf = sparse_graph_convolution(x, adj, weight, None,
                                      adj_dtype=jnp.bfloat16)
    jax.block_until_ready(out_bf)
    assert out_bf.dtype == x.dtype
    assert jnp.allclose(out_bf, ref, atol=5e-2, rtol=5e-2)

    print("KERNEL_OK")
</pallas_src>

<mosaic_0001>
module attributes {stable_mosaic.version = 11 : i64} {
  func.func @_support_kernel(%arg0: i32, %arg1: memref<128x128xf32, #tpu.memory_space<vmem>>, %arg2: memref<128x128xf32, #tpu.memory_space<vmem>>, %arg3: memref<128x128xf32, #tpu.memory_space<vmem>>) attributes {dimension_semantics = [#tpu.dimension_semantics<parallel>], iteration_bounds = array<i64: 1>, scalar_prefetch = 0 : i64, scratch_operands = 0 : i64, tpu.core_type = #tpu.core_type<tc>, window_params = [{transform_indices = @transform_0, window_bounds = array<i64: 128, 128>}, {pipeline_mode = #tpu.pipeline_mode<synchronous>, transform_indices = @transform_1, window_bounds = array<i64: 128, 128>}, {transform_indices = @transform_2, window_bounds = array<i64: 128, 128>}]} {
    %c0 = arith.constant 0 : index
    %c0_0 = arith.constant 0 : index
    %0 = vector.load %arg1[%c0, %c0_0] : memref<128x128xf32, #tpu.memory_space<vmem>>, vector<128x128xf32>
    %c0_1 = arith.constant 0 : index
    %c0_2 = arith.constant 0 : index
    %1 = vector.load %arg2[%c0_1, %c0_2] : memref<128x128xf32, #tpu.memory_space<vmem>>, vector<128x128xf32>
    %cst = arith.constant dense<0.000000e+00> : vector<128x128xf32>
    %2 = tpu.matmul %0, %1, %cst {dimension_numbers = #tpu.dot_dimension_numbers<[1], [0], [0], [1], [0, 0, 1, 1], [], []>} : vector<128x128xf32>, vector<128x128xf32>, vector<128x128xf32> -> vector<128x128xf32>
    %c0_3 = arith.constant 0 : index
    %c0_4 = arith.constant 0 : index
    %3 = vector.load %arg3[%c0_3, %c0_4] : memref<128x128xf32, #tpu.memory_space<vmem>>, vector<128x128xf32>
    tpu.vector_store %arg3[%c0_3, %c0_4], %2 {strides = array<i32>} : memref<128x128xf32, #tpu.memory_space<vmem>>, vector<128x128xf32>,
    return
  }
  func.func @transform_0(%arg0: i32) -> (i32, i32) {
    %c0_i32 = arith.constant 0 : i32
    %c0_i32_0 = arith.constant 0 : i32
    return %arg0, %c0_i32 : i32, i32
  }
  func.func @transform_1(%arg0: i32) -> (i32, i32) {
    %c0_i32 = arith.constant 0 : i32
    %c0_i32_0 = arith.constant 0 : i32
    %c0_i32_1 = arith.constant 0 : i32
    return %c0_i32, %c0_i32_0 : i32, i32
  }
  func.func @transform_2(%arg0: i32) -> (i32, i32) {
    %c0_i32 = arith.constant 0 : i32
    %c0_i32_0 = arith.constant 0 : i32
    return %arg0, %c0_i32 : i32, i32
  }
}

</mosaic_0001>

<llo_original>
// kernel: tpu_custom_call.1
$region0: #{tpu_custom_call.1}
  #allocation0 [shape = 'u32[]', space=smem, size = 0x4, offset = 0x4, fixed_abs, tag = 'smem constant byte address 0x4 - core index']
  #allocation1 [shape = 'u32[144,128]{1,0:T(1,128)}', space=vmem, size = 0x12000, scoped, tag = 'internal scratch']
  %s0 = inlined_call_operand.hbm [shape: f32[128,128], index: 0, kind: input, shape index: {}]
  %s1 = inlined_call_operand.hbm [shape: f32[128,128], index: 1, kind: input, shape index: {}]
  %s2 = inlined_call_operand.hbm [shape: f32[128,128], index: 2, kind: output, shape index: {}]
  %s3 = sld [smem:[#allocation0]]
  $region26: #{tpu_custom_call.1} parent=0
    _
  %s5 = ssub.s32 1, %s3
  %s6 = scalar_select 0, %s5, %s3
  $region1: #{tpu_custom_call.1} parent=0
    #allocation2 [shape = 'u8[65536]{0}', space=vmem, size = 0x10000, scoped, tag = 'input window, operand 0, single buffered']
    #allocation3 [shape = 's32[1]{0}', space=sflag, size = 0x4, scoped, tag = 'scoped memory for tpu_custom_call.1']
    #allocation4 [shape = 's32[1]{0}', space=sflag, size = 0x4, scoped, tag = 'scoped memory for tpu_custom_call.1']
    #allocation5 [shape = 'u8[65536]{0}', space=vmem, size = 0x10000, scoped, tag = 'input window, operand 1, single buffered']
    #allocation6 [shape = 's32[1]{0}', space=sflag, size = 0x4, scoped, tag = 'scoped memory for tpu_custom_call.1']
    #allocation7 [shape = 'u8[65536]{0}', space=vmem, size = 0x10000, scoped, tag = 'output window, operand 0, single buffered']
    %7 = vsyncpa [#allocation3], 0
    %8 = vsyncpa [#allocation6], 0
    %9 = vsyncpa [#allocation4], 0
    // Predicated region
    $region2: #{tpu_custom_call.1} parent=1 // pred_check
      _
    $region3: #{tpu_custom_call.1} parent=1 // pred_check_branch
      %11 = sbr.rel (0) target = $region5
    $region4: #{tpu_custom_call.1} parent=1 // pred_region
      %s13 = ssub.s32 2048, 2048
      %14 = vsyncadd [#allocation3], %s13
      %s15 = sshll.u32 [#allocation2], 4
      %s16 = int_to_ptr.vmem [resolvable:$true] %s15
      %21 = dma.hbm_to_vmem [thread:$0]  %s0, 2048, %s16, [#allocation3], 128, 128, 8
    $region5: #{tpu_custom_call.1} parent=1 // pred_fallthru
      _
    // Predicated region
    $region6: #{tpu_custom_call.1} parent=1 // pred_check
      _
    $region7: #{tpu_custom_call.1} parent=1 // pred_check_branch
      %23 = sbr.rel (0) target = $region9
    $region8: #{tpu_custom_call.1} parent=1 // pred_region
      %s25 = ssub.s32 2048, 2048
      %26 = vsyncadd [#allocation6], %s25
      %s27 = sshll.u32 [#allocation5], 4
      %s28 = int_to_ptr.vmem [resolvable:$true] %s27
      %33 = dma.hbm_to_vmem [thread:$0]  %s1, 2048, %s28, [#allocation6], 128, 128, 8
    $region9: #{tpu_custom_call.1} parent=1 // pred_fallthru
      _
    // Predicated region
    $region10: #{tpu_custom_call.1} parent=1 // pred_check
      _
    $region11: #{tpu_custom_call.1} parent=1 // pred_check_branch
      %35 = sbr.rel (0) target = $region13
    $region12: #{tpu_custom_call.1} parent=1 // pred_region
      %36 = dma.done [#allocation3], 2048
    $region13: #{tpu_custom_call.1} parent=1 // pred_fallthru
      _
    // Predicated region
    $region14: #{tpu_custom_call.1} parent=1 // pred_check
      _
    $region15: #{tpu_custom_call.1} parent=1 // pred_check_branch
      %38 = sbr.rel (0) target = $region17
    $region16: #{tpu_custom_call.1} parent=1 // pred_region
      %39 = dma.done [#allocation6], 2048
    $region17: #{tpu_custom_call.1} parent=1 // pred_fallthru
      _
    %v40 = vld [vmem:[#allocation2] sm:$0xff]
    %v41 = vld [vmem:[#allocation2 + $0x8] sm:$0xff]
    %v42 = vld [vmem:[#allocation2 + $0x10] sm:$0xff]
    %v43 = vld [vmem:[#allocation2 + $0x18] sm:$0xff]
    %v44 = vld [vmem:[#allocation2 + $0x20] sm:$0xff]
    %v45 = vld [vmem:[#allocation2 + $0x28] sm:$0xff]
    %v46 = vld [vmem:[#allocation2 + $0x30] sm:$0xff]
    %v47 = vld [vmem:[#allocation2 + $0x38] sm:$0xff]
    %v48 = vld [vmem:[#allocation2 + $0x40] sm:$0xff]
    %v49 = vld [vmem:[#allocation2 + $0x48] sm:$0xff]
    %v50 = vld [vmem:[#allocation2 + $0x50] sm:$0xff]
    %v51 = vld [vmem:[#allocation2 + $0x58] sm:$0xff]
    %v52 = vld [vmem:[#allocation2 + $0x60] sm:$0xff]
    %v53 = vld [vmem:[#allocation2 + $0x68] sm:$0xff]
    %v54 = vld [vmem:[#allocation2 + $0x70] sm:$0xff]
    %v55 = vld [vmem:[#allocation2 + $0x78] sm:$0xff]
    %v56 = vld [vmem:[#allocation5] sm:$0xff]
    %v57 = vld [vmem:[#allocation5 + $0x8] sm:$0xff]
    %v58 = vld [vmem:[#allocation5 + $0x10] sm:$0xff]
    %v59 = vld [vmem:[#allocation5 + $0x18] sm:$0xff]
    %v60 = vld [vmem:[#allocation5 + $0x20] sm:$0xff]
    %v61 = vld [vmem:[#allocation5 + $0x28] sm:$0xff]
    %v62 = vld [vmem:[#allocation5 + $0x30] sm:$0xff]
    %v63 = vld [vmem:[#allocation5 + $0x38] sm:$0xff]
    %v64 = vld [vmem:[#allocation5 + $0x40] sm:$0xff]
    %v65 = vld [vmem:[#allocation5 + $0x48] sm:$0xff]
    %v66 = vld [vmem:[#allocation5 + $0x50] sm:$0xff]
    %v67 = vld [vmem:[#allocation5 + $0x58] sm:$0xff]
    %v68 = vld [vmem:[#allocation5 + $0x60] sm:$0xff]
    %v69 = vld [vmem:[#allocation5 + $0x68] sm:$0xff]
    %v70 = vld [vmem:[#allocation5 + $0x70] sm:$0xff]
    %v71 = vld [vmem:[#allocation5 + $0x78] sm:$0xff]
    %72 = vmatprep.subr.mxu0 0.0
    %73 = vmatpush1.msra.mxu0 %v71
    %74 = vmatprep.subr.mxu0 0.0
    %75 = vmatpush1.msra.mxu0 %v70
    %76 = vmatprep.subr.mxu0 0.0
    %77 = vmatpush1.msra.mxu0 %v69
    %78 = vmatprep.subr.mxu0 0.0
    %79 = vmatpush1.msra.mxu0 %v68
    %80 = vmatprep.subr.mxu0 0.0
    %81 = vmatpush1.msra.mxu0 %v67
    %82 = vmatprep.subr.mxu0 0.0
    %83 = vmatpush1.msra.mxu0 %v66
    %84 = vmatprep.subr.mxu0 0.0
    %85 = vmatpush1.msra.mxu0 %v65
    %86 = vmatprep.subr.mxu0 0.0
    %87 = vmatpush1.msra.mxu0 %v64
    %88 = vmatprep.subr.mxu0 0.0
    %89 = vmatpush1.msra.mxu0 %v63
    %90 = vmatprep.subr.mxu0 0.0
    %91 = vmatpush1.msra.mxu0 %v62
    %92 = vmatprep.subr.mxu0 0.0
    %93 = vmatpush1.msra.mxu0 %v61
    %94 = vmatprep.subr.mxu0 0.0
    %95 = vmatpush1.msra.mxu0 %v60
    %96 = vmatprep.subr.mxu0 0.0
    %97 = vmatpush1.msra.mxu0 %v59
    %98 = vmatprep.subr.mxu0 0.0
    %99 = vmatpush1.msra.mxu0 %v58
    %100 = vmatprep.subr.mxu0 0.0
    %101 = vmatpush1.msra.mxu0 %v57
    %102 = vmatprep.subr.mxu0 0.0
    %103 = vmatpush1.msra.mxu0 %v56
    %104 = vmatprep.subr.mxu0 0.0
    %105 = vmatpush2.msra.mxu0 0.0
    %106 = vmatprep.subr.mxu0 0.0
    %107 = vmatpush2.msra.mxu0 0.0
    %108 = vmatprep.subr.mxu0 0.0
    %109 = vmatpush2.msra.mxu0 0.0
    %110 = vmatprep.subr.mxu0 0.0
    %111 = vmatpush2.msra.mxu0 0.0
    %112 = vmatprep.subr.mxu0 0.0
    %113 = vmatpush2.msra.mxu0 0.0
    %114 = vmatprep.subr.mxu0 0.0
    %115 = vmatpush2.msra.mxu0 0.0
    %116 = vmatprep.subr.mxu0 0.0
    %117 = vmatpush2.msra.mxu0 0.0
    %118 = vmatprep.subr.mxu0 0.0
    %119 = vmatpush2.msra.mxu0 0.0
    %120 = vmatprep.subr.mxu0 0.0
    %121 = vmatpush2.msra.mxu0 0.0
    %122 = vmatprep.subr.mxu0 0.0
    %123 = vmatpush2.msra.mxu0 0.0
    %124 = vmatprep.subr.mxu0 0.0
    %125 = vmatpush2.msra.mxu0 0.0
    %126 = vmatprep.subr.mxu0 0.0
    %127 = vmatpush2.msra.mxu0 0.0
    %128 = vmatprep.subr.mxu0 0.0
    %129 = vmatpush2.msra.mxu0 0.0
    %130 = vmatprep.subr.mxu0 0.0
    %131 = vmatpush2.msra.mxu0 0.0
    %132 = vmatprep.subr.mxu0 0.0
    %133 = vmatpush2.msra.mxu0 0.0
    %134 = vmatprep.subr.mxu0 0.0
    %135 = vmatpush2.msra.mxu0 0.0
    %136 = vmatprep.mubr.f32.mxu0 0.0
    %137 = vmatmul.mubr.f32.gmra.mxu0 %v40
    %v138 = vpop.f32.mrf.mxu0
    %v139 = vadd.f32 0.0, %v138
    %v140 = vpop.f32.mrf.mxu0
    %141 = vmatprep.mubr.f32.mxu0 0.0
    %142 = vmatmul.mubr.f32.gmra.mxu0 %v41
    %v143 = vpop.f32.mrf.mxu0
    %v144 = vadd.f32 0.0, %v143
    %v145 = vpop.f32.mrf.mxu0
    %146 = vmatprep.mubr.f32.mxu0 0.0
    %147 = vmatmul.mubr.f32.gmra.mxu0 %v42
    %v148 = vpop.f32.mrf.mxu0
    %v149 = vadd.f32 0.0, %v148
    %v150 = vpop.f32.mrf.mxu0
    %151 = vmatprep.mubr.f32.mxu0 0.0
    %152 = vmatmul.mubr.f32.gmra.mxu0 %v43
    %v153 = vpop.f32.mrf.mxu0
    %v154 = vadd.f32 0.0, %v153
    %v155 = vpop.f32.mrf.mxu0
    %156 = vmatprep.mubr.f32.mxu0 0.0
    %157 = vmatmul.mubr.f32.gmra.mxu0 %v44
    %v158 = vpop.f32.mrf.mxu0
    %v159 = vadd.f32 0.0, %v158
    %v160 = vpop.f32.mrf.mxu0
    %161 = vmatprep.mubr.f32.mxu0 0.0
    %162 = vmatmul.mubr.f32.gmra.mxu0 %v45
    %v163 = vpop.f32.mrf.mxu0
    %v164 = vadd.f32 0.0, %v163
    %v165 = vpop.f32.mrf.mxu0
    %166 = vmatprep.mubr.f32.mxu0 0.0
    %167 = vmatmul.mubr.f32.gmra.mxu0 %v46
    %v168 = vpop.f32.mrf.mxu0
    %v169 = vadd.f32 0.0, %v168
    %v170 = vpop.f32.mrf.mxu0
    %171 = vmatprep.mubr.f32.mxu0 0.0
    %172 = vmatmul.mubr.f32.gmra.mxu0 %v47
    %v173 = vpop.f32.mrf.mxu0
    %v174 = vadd.f32 0.0, %v173
    %v175 = vpop.f32.mrf.mxu0
    %176 = vmatprep.mubr.f32.mxu0 0.0
    %177 = vmatmul.mubr.f32.gmra.mxu0 %v48
    %v178 = vpop.f32.mrf.mxu0
    %v179 = vadd.f32 0.0, %v178
    %v180 = vpop.f32.mrf.mxu0
    %181 = vmatprep.mubr.f32.mxu0 0.0
    %182 = vmatmul.mubr.f32.gmra.mxu0 %v49
    %v183 = vpop.f32.mrf.mxu0
    %v184 = vadd.f32 0.0, %v183
    %v185 = vpop.f32.mrf.mxu0
    %186 = vmatprep.mubr.f32.mxu0 0.0
    %187 = vmatmul.mubr.f32.gmra.mxu0 %v50
    %v188 = vpop.f32.mrf.mxu0
    %v189 = vadd.f32 0.0, %v188
    %v190 = vpop.f32.mrf.mxu0
    %191 = vmatprep.mubr.f32.mxu0 0.0
    %192 = vmatmul.mubr.f32.gmra.mxu0 %v51
    %v193 = vpop.f32.mrf.mxu0
    %v194 = vadd.f32 0.0, %v193
    %v195 = vpop.f32.mrf.mxu0
    %196 = vmatprep.mubr.f32.mxu0 0.0
    %197 = vmatmul.mubr.f32.gmra.mxu0 %v52
    %v198 = vpop.f32.mrf.mxu0
    %v199 = vadd.f32 0.0, %v198
    %v200 = vpop.f32.mrf.mxu0
    %201 = vmatprep.mubr.f32.mxu0 0.0
    %202 = vmatmul.mubr.f32.gmra.mxu0 %v53
    %v203 = vpop.f32.mrf.mxu0
    %v204 = vadd.f32 0.0, %v203
    %v205 = vpop.f32.mrf.mxu0
    %206 = vmatprep.mubr.f32.mxu0 0.0
    %207 = vmatmul.mubr.f32.gmra.mxu0 %v54
    %v208 = vpop.f32.mrf.mxu0
    %v209 = vadd.f32 0.0, %v208
    %v210 = vpop.f32.mrf.mxu0
    %211 = vmatprep.mubr.f32.mxu0 0.0
    %212 = vmatmul.mubr.f32.gmra.mxu0 %v55
    %v213 = vpop.f32.mrf.mxu0
    %v214 = vadd.f32 0.0, %v213
    %v215 = vpop.f32.mrf.mxu0
    %216 = vdwg.mxu0
    %217 = vst [vmem:[#allocation7] sm:$0xff] %v139
    %218 = vst [vmem:[#allocation7 + $0x8] sm:$0xff] %v144
    %219 = vst [vmem:[#allocation7 + $0x10] sm:$0xff] %v149
    %220 = vst [vmem:[#allocation7 + $0x18] sm:$0xff] %v154
    %221 = vst [vmem:[#allocation7 + $0x20] sm:$0xff] %v159
    %222 = vst [vmem:[#allocation7 + $0x28] sm:$0xff] %v164
    %223 = vst [vmem:[#allocation7 + $0x30] sm:$0xff] %v169
    %224 = vst [vmem:[#allocation7 + $0x38] sm:$0xff] %v174
    %225 = vst [vmem:[#allocation7 + $0x40] sm:$0xff] %v179
    %226 = vst [vmem:[#allocation7 + $0x48] sm:$0xff] %v184
    %227 = vst [vmem:[#allocation7 + $0x50] sm:$0xff] %v189
    %228 = vst [vmem:[#allocation7 + $0x58] sm:$0xff] %v194
    %229 = vst [vmem:[#allocation7 + $0x60] sm:$0xff] %v199
    %230 = vst [vmem:[#allocation7 + $0x68] sm:$0xff] %v204
    %231 = vst [vmem:[#allocation7 + $0x70] sm:$0xff] %v209
    %232 = vst [vmem:[#allocation7 + $0x78] sm:$0xff] %v214
    // Predicated region
    $region18: #{tpu_custom_call.1} parent=1 // pred_check
      _
    $region19: #{tpu_custom_call.1} parent=1 // pred_check_branch
      %234 = sbr.rel (0) target = $region21
    $region20: #{tpu_custom_call.1} parent=1 // pred_region
      %s236 = ssub.s32 2048, 2048
      %237 = vsyncadd [#allocation4], %s236
      %s238 = sshll.u32 [#allocation7], 4
      %s239 = int_to_ptr.vmem [resolvable:$true] %s238
      %244 = dma.vmem_to_hbm [thread:$0]  %s239, 2048, %s2, [#allocation4], 128, 128, 8
    $region21: #{tpu_custom_call.1} parent=1 // pred_fallthru
      _
    // Predicated region
    $region22: #{tpu_custom_call.1} parent=1 // pred_check
      _
    $region23: #{tpu_custom_call.1} parent=1 // pred_check_branch
      %246 = sbr.rel (0) target = $region25
    $region24: #{tpu_custom_call.1} parent=1 // pred_region
      %247 = dma.done [#allocation4], 2048
    $region25: #{tpu_custom_call.1} parent=1 // pred_fallthru
      _
    %248 = vsyncpa [#allocation3], 1
    %249 = vsyncpa [#allocation6], 1
    %250 = vsyncpa [#allocation4], 1

</llo_original>
